<compile_context>
chip_gen: v6e
topology: v6e:2x2x1
jax: 0.10.0
libtpu: 0.0.40
codegen_flags: <defaults>
</compile_context>

<pallas_src>
import functools

import jax
import jax.numpy as jnp
from jax.experimental import pallas as pl
from jax.experimental.pallas import tpu as pltpu

_LANES = 128


def _ce_partial_kernel(x_ref, label_ref, partial_ref, *, true_bsz, tb):
    """Per-block partial cross-entropy sums.

    x_ref:       (TB, K)   logits (any float dtype; promoted to f32)
    label_ref:   (TB, 1)   int32 labels
    partial_ref: (1, 128)  f32 — block partial sum broadcast across lanes
    """
    i = pl.program_id(0)

    x = x_ref[...].astype(jnp.float32)                        # (TB, K)
    b, k = x.shape

    # numerically stable per-row logsumexp
    m = jnp.max(x, axis=-1, keepdims=True)                    # (TB, 1)
    lse = jnp.log(jnp.sum(jnp.exp(x - m), axis=-1, keepdims=True)) + m

    # gather x[r, label[r]] with a select (no one-hot f32 multiply)
    labels = label_ref[...]                                    # (TB, 1) int32
    col_ids = jax.lax.broadcasted_iota(jnp.int32, (b, k), 1)   # (TB, K)
    picked = jnp.sum(jnp.where(col_ids == labels, x, 0.0),
                     axis=-1, keepdims=True)                   # (TB, 1)

    per_example = lse - picked                                 # (TB, 1)

    # mask rows beyond the true batch size (padded last block)
    row_ids = jax.lax.broadcasted_iota(jnp.int32, (b, 1), 0) + i * tb
    per_example = jnp.where(row_ids < true_bsz, per_example, 0.0)

    psum = jnp.sum(per_example)                                # scalar
    # lane-dense, unmasked store of this block's partial sum
    partial_ref[...] = jnp.broadcast_to(psum, (1, _LANES)).astype(jnp.float32)


def _round_up(n, m):
    return ((n + m - 1) // m) * m


def nce_softmax_loss(x, label):
    """Equivalent of NCESoftmaxLoss().forward(x, label): mean cross-entropy."""
    # mirror x.squeeze() for the usual (bsz, K, 1) NCE head output
    if x.ndim == 3 and x.shape[-1] == 1:
        x2d = jnp.squeeze(x, axis=-1)
    else:
        x2d = x
    assert x2d.ndim == 2, "expected logits of shape (bsz, K)"
    bsz, k = x2d.shape

    # batch tile: multiple of 8 sublanes, ~<=4 MiB per (TB, K) buffer, <=512 rows
    bytes_per_row = k * jnp.dtype(x2d.dtype).itemsize
    tb = max(8, min(512, (4 * 1024 * 1024 // max(bytes_per_row, 1)) // 8 * 8))
    tb = min(tb, _round_up(bsz, 8))
    num_blocks = pl.cdiv(bsz, tb)
    padded_bsz = num_blocks * tb

    # pad so every grid block is full (no-op when bsz % tb == 0)
    if padded_bsz != bsz:
        x2d = jnp.pad(x2d, ((0, padded_bsz - bsz), (0, 0)))
    label2d = jnp.zeros((padded_bsz, 1), jnp.int32).at[:bsz, 0].set(
        label.astype(jnp.int32))

    kernel = functools.partial(_ce_partial_kernel, true_bsz=bsz, tb=tb)

    partials = pl.pallas_call(
        kernel,
        out_shape=jax.ShapeDtypeStruct((num_blocks, _LANES), jnp.float32),
        grid=(num_blocks,),
        in_specs=[
            pl.BlockSpec((tb, k), lambda i: (i, 0)),
            pl.BlockSpec((tb, 1), lambda i: (i, 0)),
        ],
        out_specs=pl.BlockSpec((1, _LANES), lambda i: (i, 0)),
        compiler_params=pltpu.CompilerParams(
            dimension_semantics=("parallel",),   # megacore-shardable on v7x
            vmem_limit_bytes=32 * 1024 * 1024,
        ),
    )(x2d, label2d)

    # TODO(synk): for very large K (>=~32k on v7x) add a second 'arbitrary'
    # grid axis over K with an online logsumexp so a (TB, K) row window never
    # has to fit in VMEM at once.

    # tiny final reduction in plain JAX (all 128 lanes hold the same value)
    return jnp.sum(partials[:, 0]) / jnp.float32(bsz)


if __name__ == "__main__":
    key = jax.random.PRNGKey(0)
    kx, kl = jax.random.split(key)

    bsz, n_classes = 8, 128
    # typical NCE head output: (bsz, K, 1) logits
    x = jax.random.normal(kx, (bsz, n_classes, 1), dtype=jnp.float32)
    label = jax.random.randint(kl, (bsz,), 0, n_classes, dtype=jnp.int32)

    loss = nce_softmax_loss(x, label)
    jax.block_until_ready(loss)

    # reference check (plain JAX cross-entropy, mean reduction)
    x2d = jnp.squeeze(x, axis=-1)
    logp = jax.nn.log_softmax(x2d, axis=-1)
    ref = -jnp.mean(logp[jnp.arange(bsz), label])
    assert jnp.allclose(loss, ref, atol=1e-5, rtol=1e-5), (loss, ref)

    # exercise the padded / masked last-block path (bsz not a multiple of 8)
    bsz2 = 6
    x2 = jax.random.normal(kx, (bsz2, n_classes, 1), dtype=jnp.float32)
    label2 = jax.random.randint(kl, (bsz2,), 0, n_classes, dtype=jnp.int32)
    loss2 = nce_softmax_loss(x2, label2)
    jax.block_until_ready(loss2)
    logp2 = jax.nn.log_softmax(jnp.squeeze(x2, axis=-1), axis=-1)
    ref2 = -jnp.mean(logp2[jnp.arange(bsz2), label2])
    assert jnp.allclose(loss2, ref2, atol=1e-5, rtol=1e-5), (loss2, ref2)

    print("KERNEL_OK")
</pallas_src>

<mosaic_0001>
module attributes {stable_mosaic.version = 11 : i64} {
  func.func @_ce_partial_kernel(%arg0: i32, %arg1: memref<8x128xf32, #tpu.memory_space<vmem>>, %arg2: memref<8x1xi32, #tpu.memory_space<vmem>>, %arg3: memref<1x128xf32, #tpu.memory_space<vmem>>) attributes {dimension_semantics = [#tpu.dimension_semantics<parallel>], iteration_bounds = array<i64: 1>, scalar_prefetch = 0 : i64, scratch_operands = 0 : i64, tpu.core_type = #tpu.core_type<tc>, window_params = [{transform_indices = @transform_0, window_bounds = array<i64: 8, 128>}, {transform_indices = @transform_1, window_bounds = array<i64: 8, 1>}, {transform_indices = @transform_2, window_bounds = array<i64: 1, 128>}]} {
    %c0 = arith.constant 0 : index
    %c0_0 = arith.constant 0 : index
    %0 = vector.load %arg1[%c0, %c0_0] : memref<8x128xf32, #tpu.memory_space<vmem>>, vector<8x128xf32>
    %cst = arith.constant dense<0xFF800000> : vector<8xf32>
    %1 = vector.multi_reduction <maximumf>, %0, %cst [1] : vector<8x128xf32> to vector<8xf32>
    %2 = vector.shape_cast %1 : vector<8xf32> to vector<8x1xf32>
    %3 = vector.broadcast %2 : vector<8x1xf32> to vector<8x128xf32>
    %4 = arith.subf %0, %3 : vector<8x128xf32>
    %5 = math.exp %4 : vector<8x128xf32>
    %cst_1 = arith.constant dense<0.000000e+00> : vector<8xf32>
    %6 = vector.multi_reduction <add>, %5, %cst_1 [1] : vector<8x128xf32> to vector<8xf32>
    %7 = vector.shape_cast %6 : vector<8xf32> to vector<8x1xf32>
    %8 = math.log %7 : vector<8x1xf32>
    %9 = arith.addf %8, %2 : vector<8x1xf32>
    %c0_2 = arith.constant 0 : index
    %c0_3 = arith.constant 0 : index
    %10 = vector.load %arg2[%c0_2, %c0_3] : memref<8x1xi32, #tpu.memory_space<vmem>>, vector<8x1xi32>
    %11 = tpu.iota {dimensions = array<i32: 1>} : vector<8x128xi32>
    %12 = vector.broadcast %10 : vector<8x1xi32> to vector<8x128xi32>
    %13 = arith.cmpi eq, %11, %12 : vector<8x128xi32>
    %cst_4 = arith.constant 0.000000e+00 : f32
    %14 = vector.broadcast %cst_4 : f32 to vector<8x128xf32>
    %15 = arith.select %13, %0, %14 : vector<8x128xi1>, vector<8x128xf32>
    %cst_5 = arith.constant dense<0.000000e+00> : vector<8xf32>
    %16 = vector.multi_reduction <add>, %15, %cst_5 [1] : vector<8x128xf32> to vector<8xf32>
    %17 = vector.shape_cast %16 : vector<8xf32> to vector<8x1xf32>
    %18 = arith.subf %9, %17 : vector<8x1xf32>
    %19 = tpu.iota {dimensions = array<i32: 0>} : vector<8x1xi32>
    %c8_i32 = arith.constant 8 : i32
    %20 = arith.muli %arg0, %c8_i32 : i32
    %21 = vector.broadcast %20 : i32 to vector<8x1xi32>
    %22 = arith.addi %19, %21 : vector<8x1xi32>
    %c8_i32_6 = arith.constant 8 : i32
    %23 = vector.broadcast %c8_i32_6 : i32 to vector<8x1xi32>
    %24 = arith.cmpi slt, %22, %23 : vector<8x1xi32>
    %cst_7 = arith.constant 0.000000e+00 : f32
    %25 = vector.broadcast %cst_7 : f32 to vector<8x1xf32>
    %26 = arith.select %24, %18, %25 : vector<8x1xi1>, vector<8x1xf32>
    %27 = vector.shape_cast %26 : vector<8x1xf32> to vector<1x8x1xf32>
    %cst_8 = arith.constant dense<0.000000e+00> : vector<1xf32>
    %28 = vector.multi_reduction <add>, %27, %cst_8 [1, 2] : vector<1x8x1xf32> to vector<1xf32>
    %29 = vector.shape_cast %28 : vector<1xf32> to vector<1x1x1xf32>
    %30 = vector.extract %29[0, 0, 0] : f32 from vector<1x1x1xf32>
    %31 = vector.broadcast %30 : f32 to vector<1x128xf32>
    %c0_9 = arith.constant 0 : index
    %c0_10 = arith.constant 0 : index
    %32 = vector.load %arg3[%c0_9, %c0_10] : memref<1x128xf32, #tpu.memory_space<vmem>>, vector<1x128xf32>
    tpu.vector_store %arg3[%c0_9, %c0_10], %31 {strides = array<i32>} : memref<1x128xf32, #tpu.memory_space<vmem>>, vector<1x128xf32>,
    return
  }
  func.func @transform_0(%arg0: i32) -> (i32, i32) {
    %c0_i32 = arith.constant 0 : i32
    %c0_i32_0 = arith.constant 0 : i32
    return %arg0, %c0_i32 : i32, i32
  }
  func.func @transform_1(%arg0: i32) -> (i32, i32) {
    %c0_i32 = arith.constant 0 : i32
    %c0_i32_0 = arith.constant 0 : i32
    return %arg0, %c0_i32 : i32, i32
  }
  func.func @transform_2(%arg0: i32) -> (i32, i32) {
    %c0_i32 = arith.constant 0 : i32
    %c0_i32_0 = arith.constant 0 : i32
    return %arg0, %c0_i32 : i32, i32
  }
}

</mosaic_0001>

<llo_original>
// kernel: tpu_custom_call.1
$region0: #{tpu_custom_call.1}
  #allocation0 [shape = 'u32[]', space=smem, size = 0x4, offset = 0x4, fixed_abs, tag = 'smem constant byte address 0x4 - core index']
  #allocation1 [shape = 'u32[144,128]{1,0:T(1,128)}', space=vmem, size = 0x12000, scoped, tag = 'internal scratch']
  %s0 = inlined_call_operand.vmem [shape: f32[8,128], index: 0, kind: input, shape index: {}]
  %s1 = inlined_call_operand.vmem [shape: s32[8,1], index: 1, kind: input, shape index: {}]
  %s2 = inlined_call_operand.hbm [shape: f32[1,128], index: 2, kind: output, shape index: {}]
  %s3 = sld [smem:[#allocation0]]
  $region18: #{tpu_custom_call.1} parent=0
    _
  %s5 = ssub.s32 1, %s3
  %s6 = scalar_select 0, %s5, %s3
  $region1: #{tpu_custom_call.1} parent=0
    #allocation2 [shape = 'u8[512]{0}', space=vmem, size = 0x400, scoped, tag = 'output window, operand 0, single buffered']
    #allocation3 [shape = 's32[1]{0}', space=sflag, size = 0x4, scoped, tag = 'scoped memory for tpu_custom_call.1']
    %7 = vsyncpa [#allocation3], 0
    // Predicated region
    $region2: #{tpu_custom_call.1} parent=1 // pred_check
      _
    $region3: #{tpu_custom_call.1} parent=1 // pred_check_branch
      %9 = sbr.rel (0) target = $region5
    $region4: #{tpu_custom_call.1} parent=1 // pred_region
      _
    $region5: #{tpu_custom_call.1} parent=1 // pred_fallthru
      _
    // Predicated region
    $region6: #{tpu_custom_call.1} parent=1 // pred_check
      _
    $region7: #{tpu_custom_call.1} parent=1 // pred_check_branch
      %11 = sbr.rel (0) target = $region9
    $region8: #{tpu_custom_call.1} parent=1 // pred_region
      _
    $region9: #{tpu_custom_call.1} parent=1 // pred_fallthru
      _
    %v12 = vld [vmem:[%s0] sm:$0xff]
    %13 = vmax.xlane.f32.xlu0 %v12
    %v14 = vpop.xlane.xlu0 %13
    %v15 = vsub.f32 %v12, %v14
    %v16 = vmul.f32 %v15, 1.442695
    %v17 = vpow.pop %v16
    %18 = vadd.xlane.f32.xlu0 %v17
    %v19 = vpop.xlane.xlu0 %18
    %v20 = vlog2.pop %v19
    %v21 = vmul.f32 %v20, 0.6931472
    %v22 = vadd.f32 %v21, %v14
    %v23 = vld [vmem:[%s1] sm:$0xff]
    %v24 = vlaneseq
    %v25 = vand.u32 %v24, 127
    %26 = vset.pattern.permute.xlu0 0
    %27 = vperm.xlu0 %26, %v23
    %v28 = vpop.permute.xlu0 %27
    %vm29 = vcmp.eq.s32.totalorder %v25, %v28
    %v30 = vsel %vm29, %v12, 0.0
    %31 = vadd.xlane.f32.xlu0 %v30
    %v32 = vpop.xlane.xlu0 %31
    %v33 = vsub.f32 %v22, %v32
    %v34 = vlaneseq
    %v35 = vshrl.u32 %v34, 7
    %s36 = smul.u32 0, 8
    %v37 = vstv %s36
    %v38 = vadd.s32 %v35, %v37
    %vm39 = vcmp.lt.s32.totalorder %v38, 8
    %v40 = vsel %vm39, %v33, 0.0
    %vm41 = vcmask 7168
    %v42 = vsel %vm41, %v40, 0.0
    %43 = vadd.xlane.f32.xlu0 %v42
    %v44 = vpop.xlane.xlu0 %43
    %v45 = vrot.slane %v44, 4
    %v46 = vadd.f32 %v44, %v45
    %v47 = vrot.slane %v46, 2
    %v48 = vadd.f32 %v46, %v47
    %v49 = vrot.slane %v48, 1
    %v50 = vadd.f32 %v48, %v49
    %s51 = vtos %v50
    %v52 = vstv %s51
    %53 = vst [vmem:[#allocation2] sm:$0x1] %v52
    // Predicated region
    $region10: #{tpu_custom_call.1} parent=1 // pred_check
      _
    $region11: #{tpu_custom_call.1} parent=1 // pred_check_branch
      %55 = sbr.rel (0) target = $region13
    $region12: #{tpu_custom_call.1} parent=1 // pred_region
      %s57 = ssub.s32 16, 16
      %58 = vsyncadd [#allocation3], %s57
      %s60 = sshll.u32 [#allocation2], 4
      %s61 = int_to_ptr.vmem [resolvable:$true] %s60
      %63 = dma.vmem_to_hbm [thread:$0]  %s61, 16, %s2, [#allocation3]
    $region13: #{tpu_custom_call.1} parent=1 // pred_fallthru
      _
    // Predicated region
    $region14: #{tpu_custom_call.1} parent=1 // pred_check
      _
    $region15: #{tpu_custom_call.1} parent=1 // pred_check_branch
      %65 = sbr.rel (0) target = $region17
    $region16: #{tpu_custom_call.1} parent=1 // pred_region
      %66 = dma.done [#allocation3], 16
    $region17: #{tpu_custom_call.1} parent=1 // pred_fallthru
      _
    %67 = vsyncpa [#allocation3], 1

</llo_original>
